<compile_context>
chip_gen: v7x
topology: tpu7x:2x2x1
jax: 0.10.0
libtpu: 0.0.40
codegen_flags: <defaults>
</compile_context>

<pallas_src>
import numpy as np
import jax
import jax.numpy as jnp
from jax import lax
from jax.experimental import pallas as pl
from jax.experimental.pallas import tpu as pltpu


_KRON_BYTES_MAX = 8 * 1024 * 1024  # fuse upsample as one matmul below this size


def _vmem_limit(block_bytes):
    """Explicit scoped-VMEM budget with headroom, clamped for all generations."""
    return int(min(48 * 1024 * 1024, max(8 * 1024 * 1024, 3 * block_bytes)))


def _bilinear_matrix(n_in, n_out):
    """(n_out, n_in) matrix for 1-D bilinear interpolation, align_corners=True
    (matches F.interpolate(..., mode='bilinear', align_corners=True))."""
    if n_in == 1:
        return jnp.ones((n_out, 1), jnp.float32)
    src = jnp.arange(n_out, dtype=jnp.float32) * (n_in - 1) / (n_out - 1)
    i0 = jnp.clip(jnp.floor(src).astype(jnp.int32), 0, n_in - 2)
    frac = src - i0.astype(jnp.float32)
    rows = jnp.arange(n_out)
    m = jnp.zeros((n_out, n_in), jnp.float32)
    m = m.at[rows, i0].add(1.0 - frac)
    m = m.at[rows, i0 + 1].add(frac)
    return m


def conv3x3_gn_relu(x, weight, gamma, beta, *, num_groups=32, eps=1e-5,
                    upsample=False):
    """x: (B, Cin, H, W); weight: (Cout, Cin, 3, 3); gamma/beta: (Cout,)."""
    B, Cin, H, W = x.shape
    Cout = weight.shape[0]
    assert weight.shape == (Cout, Cin, 3, 3)
    assert Cout % num_groups == 0
    gs = Cout // num_groups
    HW = H * W
    # H-padded image, flattened lane-dense, with one zero guard element on each
    # end so every tap is a valid static lane-slice of length H*W.
    L = (H + 2) * W + 2

    # ---- host-side layout plumbing only (no compute hoisted) -----------------
    xp = jnp.pad(x, ((0, 0), (0, 0), (1, 1), (0, 0))).reshape(B, Cin, (H + 2) * W)
    xp = jnp.pad(xp, ((0, 0), (0, 0), (1, 1))).astype(jnp.bfloat16)      # (B,Cin,L)
    # stacked tap weights: K index = t*Cin + ci, tap t = (kh, kw) = (t//3, t%3)
    wstack = jnp.transpose(weight, (0, 2, 3, 1)).reshape(Cout, 9 * Cin)
    wstack = wstack.astype(jnp.bfloat16)
    gamma2 = gamma.reshape(Cout, 1).astype(jnp.float32)
    beta2 = beta.reshape(Cout, 1).astype(jnp.float32)
    # group-mixing matrix: gmix @ per-channel-sum == per-channel group mean
    cid = jnp.arange(Cout) // gs
    gmix = (cid[:, None] == cid[None, :]).astype(jnp.float32) / float(gs * HW)

    fuse_up = upsample and (HW * (4 * HW) * 4 <= _KRON_BYTES_MAX)
    out_lanes = 4 * HW if fuse_up else HW

    if fuse_up:
        ah = _bilinear_matrix(H, 2 * H)                       # (Ho, H)
        aw = _bilinear_matrix(W, 2 * W)                       # (Wo, W)
        # separable bilinear as one (HW, Ho*Wo) matrix (small images only)
        kron = jnp.einsum('ph,qw->hwpq', ah, aw).reshape(HW, 4 * HW)
        kron = kron.astype(jnp.float32)

    def kernel(x_ref, w_ref, g_ref, b_ref, m_ref, *rest):
        if fuse_up:
            kron_ref, out_ref = rest
        else:
            (out_ref,) = rest
        xin = x_ref[0]                                        # (Cin, L) bf16
        zero = jnp.zeros((), xin.dtype)
        col = lax.broadcasted_iota(jnp.int32, (1, HW), 1) % W
        not_first = col != 0            # mask when a tap reads column w-1
        not_last = col != (W - 1)       # mask when a tap reads column w+1

        # ---- 3x3 conv: stack the 9 shifted taps, one MXU matmul --------------
        taps = []
        for t in range(9):
            dh, dw = t // 3 - 1, t % 3 - 1
            start = 1 + (dh + 1) * W + dw
            xs = xin[:, start:start + HW]                     # (Cin, HW) bf16
            if dw == -1:
                xs = jnp.where(not_first, xs, zero)
            elif dw == 1:
                xs = jnp.where(not_last, xs, zero)
            taps.append(xs)
        xstack = jnp.concatenate(taps, axis=0)                # (9*Cin, HW)
        acc = jnp.dot(w_ref[...], xstack,
                      preferred_element_type=jnp.float32)     # (Cout, HW) f32

        # ---- GroupNorm(num_groups): lane reduce + tiny group-mix matmuls -----
        s = jnp.sum(acc, axis=1, keepdims=True)               # (Cout, 1)
        sq = jnp.sum(acc * acc, axis=1, keepdims=True)        # (Cout, 1)
        mean = jnp.dot(m_ref[...], s, preferred_element_type=jnp.float32)
        ex2 = jnp.dot(m_ref[...], sq, preferred_element_type=jnp.float32)
        var = ex2 - mean * mean
        inv = lax.rsqrt(var + eps)
        y = jnp.maximum((acc - mean) * (inv * g_ref[...]) + b_ref[...], 0.0)

        # ---- optional fused bilinear x2 upsample, lane-dense store -----------
        if fuse_up:
            out_ref[0] = jnp.dot(y, kron_ref[...],
                                 preferred_element_type=jnp.float32)  # (Cout,4HW)
        else:
            out_ref[0] = y                                             # (Cout,HW)

    in_specs = [
        pl.BlockSpec((1, Cin, L), lambda b: (b, 0, 0)),
        pl.BlockSpec((Cout, 9 * Cin), lambda b: (0, 0)),
        pl.BlockSpec((Cout, 1), lambda b: (0, 0)),
        pl.BlockSpec((Cout, 1), lambda b: (0, 0)),
        pl.BlockSpec((Cout, Cout), lambda b: (0, 0)),
    ]
    args = [xp, wstack, gamma2, beta2, gmix]
    if fuse_up:
        in_specs.append(pl.BlockSpec((HW, 4 * HW), lambda b: (0, 0)))
        args.append(kron)

    blk = (2 * Cin * L * 2
           + 2 * Cout * 9 * Cin * 2
           + 2 * (Cout * Cout + 2 * Cout) * 4
           + 2 * Cout * out_lanes * 4
           + 9 * Cin * HW * 2 + Cout * HW * 4)                # in-kernel temporaries
    if fuse_up:
        blk += 2 * HW * 4 * HW * 4

    out = pl.pallas_call(
        kernel,
        out_shape=jax.ShapeDtypeStruct((B, Cout, out_lanes), jnp.float32),
        grid=(B,),
        in_specs=in_specs,
        out_specs=pl.BlockSpec((1, Cout, out_lanes), lambda b: (b, 0, 0)),
        compiler_params=pltpu.CompilerParams(
            dimension_semantics=("parallel",),
            vmem_limit_bytes=_vmem_limit(blk)),
    )(*args)

    if fuse_up:
        return out.reshape(B, Cout, 2 * H, 2 * W)
    y = out.reshape(B, Cout, H, W)
    if not upsample:
        return y

    # ---- fallback (large images): separable bilinear x2 with tiny matrices ----
    Ho, Wo = 2 * H, 2 * W
    ah = _bilinear_matrix(H, Ho)          # (Ho, H)
    awt = _bilinear_matrix(W, Wo).T       # (W, Wo)

    def upsample_kernel(y_ref, ah_ref, awt_ref, out_ref):
        yb = y_ref[0]                                                  # (C, H, W)
        z = jnp.dot(yb.reshape(Cout * H, W), awt_ref[...],
                    preferred_element_type=jnp.float32)                # (C*H, Wo)
        z = z.reshape(Cout, H, Wo)
        ah_b = jnp.broadcast_to(ah_ref[...], (Cout, Ho, H))
        o = jnp.einsum('cph,chq->cpq', ah_b, z,
                       preferred_element_type=jnp.float32)             # (C,Ho,Wo)
        out_ref[0] = o.reshape(Cout, Ho * Wo)                          # lane-dense

    vmem2 = _vmem_limit(2 * Cout * HW * 4 + (Ho * H + W * Wo) * 4
                        + 2 * Cout * Ho * Wo * 4)
    out2 = pl.pallas_call(
        upsample_kernel,
        out_shape=jax.ShapeDtypeStruct((B, Cout, Ho * Wo), jnp.float32),
        grid=(B,),
        in_specs=[
            pl.BlockSpec((1, Cout, H, W), lambda b: (b, 0, 0, 0)),
            pl.BlockSpec((Ho, H), lambda b: (0, 0)),
            pl.BlockSpec((W, Wo), lambda b: (0, 0)),
        ],
        out_specs=pl.BlockSpec((1, Cout, Ho * Wo), lambda b: (b, 0, 0)),
        compiler_params=pltpu.CompilerParams(
            dimension_semantics=("parallel",), vmem_limit_bytes=vmem2),
    )(y, ah, awt)
    return out2.reshape(B, Cout, Ho, Wo)
    # TODO(synk): for very large C / H*W, tile channels and the spatial (lane)
    # axis with halo exchange instead of one full-image block per grid step.


# ------------------------------------------------------------------------------
# Plain-JAX reference (same bf16 conv operands / f32 accumulation as the kernel)
# ------------------------------------------------------------------------------
def reference_forward(x, weight, gamma, beta, *, num_groups=32, eps=1e-5,
                      upsample=False):
    y = lax.conv_general_dilated(
        x.astype(jnp.bfloat16), weight.astype(jnp.bfloat16),
        window_strides=(1, 1), padding=((1, 1), (1, 1)),
        dimension_numbers=('NCHW', 'OIHW', 'NCHW'),
        preferred_element_type=jnp.float32)
    B, C, H, W = y.shape
    g = y.reshape(B, num_groups, (C // num_groups) * H * W)
    mean = g.mean(axis=2, keepdims=True)
    ex2 = (g * g).mean(axis=2, keepdims=True)
    inv = lax.rsqrt(ex2 - mean * mean + eps)
    yn = ((g - mean) * inv).reshape(B, C, H, W)
    yn = yn * gamma[None, :, None, None] + beta[None, :, None, None]
    yn = jnp.maximum(yn, 0.0)
    if upsample:
        ah = _bilinear_matrix(H, 2 * H)
        aw = _bilinear_matrix(W, 2 * W)
        yn = jnp.einsum('ph,bchw->bcpw', ah, yn)
        yn = jnp.einsum('qw,bcpw->bcpq', aw, yn)
    return yn


if __name__ == "__main__":
    key = jax.random.PRNGKey(0)
    B, Cin, Cout, H, W = 2, 16, 64, 16, 16     # GroupNorm(32, 64) -> groups of 2
    k1, k2, k3, k4 = jax.random.split(key, 4)
    x = jax.random.normal(k1, (B, Cin, H, W), jnp.float32)
    weight = jax.random.normal(k2, (Cout, Cin, 3, 3), jnp.float32) * 0.1
    gamma = 1.0 + 0.1 * jax.random.normal(k3, (Cout,), jnp.float32)
    beta = 0.1 * jax.random.normal(k4, (Cout,), jnp.float32)

    # upsample=False path
    out0 = jax.block_until_ready(
        conv3x3_gn_relu(x, weight, gamma, beta, upsample=False))
    ref0 = reference_forward(x, weight, gamma, beta, upsample=False)
    np.testing.assert_allclose(np.asarray(out0), np.asarray(ref0),
                               rtol=1e-3, atol=1e-3)

    # upsample=True path (fully fused conv+GN+ReLU+bilinear-x2 kernel)
    out1 = jax.block_until_ready(
        conv3x3_gn_relu(x, weight, gamma, beta, upsample=True))
    ref1 = reference_forward(x, weight, gamma, beta, upsample=True)
    np.testing.assert_allclose(np.asarray(out1), np.asarray(ref1),
                               rtol=1e-3, atol=1e-3)

    print("KERNEL_OK")
</pallas_src>

<mosaic_0001>
module attributes {stable_mosaic.version = 11 : i64} {
  func.func @kernel(%arg0: i32, %arg1: memref<1x16x290xbf16, #tpu.memory_space<vmem>>, %arg2: memref<64x144xbf16, #tpu.memory_space<vmem>>, %arg3: memref<64x1xf32, #tpu.memory_space<vmem>>, %arg4: memref<64x1xf32, #tpu.memory_space<vmem>>, %arg5: memref<64x64xf32, #tpu.memory_space<vmem>>, %arg6: memref<1x64x256xf32, #tpu.memory_space<vmem>>) attributes {dimension_semantics = [#tpu.dimension_semantics<parallel>], iteration_bounds = array<i64: 2>, scalar_prefetch = 0 : i64, scratch_operands = 0 : i64, tpu.core_type = #tpu.core_type<tc>, window_params = [{transform_indices = @transform_0, window_bounds = array<i64: 1, 16, 290>}, {pipeline_mode = #tpu.pipeline_mode<synchronous>, transform_indices = @transform_1, window_bounds = array<i64: 64, 144>}, {pipeline_mode = #tpu.pipeline_mode<synchronous>, transform_indices = @transform_2, window_bounds = array<i64: 64, 1>}, {pipeline_mode = #tpu.pipeline_mode<synchronous>, transform_indices = @transform_3, window_bounds = array<i64: 64, 1>}, {pipeline_mode = #tpu.pipeline_mode<synchronous>, transform_indices = @transform_4, window_bounds = array<i64: 64, 64>}, {transform_indices = @transform_5, window_bounds = array<i64: 1, 64, 256>}]} {
    %c0 = arith.constant 0 : index
    %c0_0 = arith.constant 0 : index
    %c0_1 = arith.constant 0 : index
    %0 = vector.load %arg1[%c0, %c0_0, %c0_1] : memref<1x16x290xbf16, #tpu.memory_space<vmem>>, vector<1x16x290xbf16>
    %1 = vector.shape_cast %0 : vector<1x16x290xbf16> to vector<16x290xbf16>
    %2 = tpu.iota {dimensions = array<i32: 1>} : vector<1x256xi32>
    %c16_i32 = arith.constant 16 : i32
    %c0_i32 = arith.constant 0 : i32
    %3 = arith.cmpi eq, %c16_i32, %c0_i32 : i32
    %c1_i32 = arith.constant 1 : i32
    %4 = arith.select %3, %c1_i32, %c16_i32 : i32
    %5 = vector.broadcast %4 : i32 to vector<1x256xi32>
    %6 = arith.remsi %2, %5 : vector<1x256xi32>
    %c0_i32_2 = arith.constant 0 : i32
    %7 = vector.broadcast %c0_i32_2 : i32 to vector<1x256xi32>
    %8 = arith.cmpi ne, %6, %7 : vector<1x256xi32>
    %c0_i32_3 = arith.constant 0 : i32
    %9 = vector.broadcast %c0_i32_3 : i32 to vector<1x256xi32>
    %10 = arith.cmpi slt, %6, %9 : vector<1x256xi32>
    %c0_i32_4 = arith.constant 0 : i32
    %11 = arith.cmpi slt, %4, %c0_i32_4 : i32
    %12 = vector.broadcast %11 : i1 to vector<1x256xi1>
    %13 = vector.broadcast %12 : vector<1x256xi1> to vector<1x256xi1>
    %14 = arith.xori %10, %13 : vector<1x256xi1>
    %15 = arith.andi %14, %8 : vector<1x256xi1>
    %16 = vector.broadcast %4 : i32 to vector<1x256xi32>
    %17 = arith.addi %6, %16 : vector<1x256xi32>
    %18 = arith.select %15, %17, %6 : vector<1x256xi1>, vector<1x256xi32>
    %c0_i32_5 = arith.constant 0 : i32
    %19 = vector.broadcast %c0_i32_5 : i32 to vector<1x256xi32>
    %20 = arith.cmpi ne, %18, %19 : vector<1x256xi32>
    %c15_i32 = arith.constant 15 : i32
    %21 = vector.broadcast %c15_i32 : i32 to vector<1x256xi32>
    %22 = arith.cmpi ne, %18, %21 : vector<1x256xi32>
    %23 = vector.extract_strided_slice %1 {offsets = [0, 0], sizes = [16, 256], strides = [1, 1]} : vector<16x290xbf16> to vector<16x256xbf16>
    %cst = arith.constant 0.000000e+00 : bf16
    %24 = vector.shape_cast %20 : vector<1x256xi1> to vector<1x256xi1>
    %25 = vector.broadcast %24 : vector<1x256xi1> to vector<16x256xi1>
    %26 = vector.broadcast %cst : bf16 to vector<16x256xbf16>
    %27 = arith.select %25, %23, %26 : vector<16x256xi1>, vector<16x256xbf16>
    %28 = vector.extract_strided_slice %1 {offsets = [0, 1], sizes = [16, 256], strides = [1, 1]} : vector<16x290xbf16> to vector<16x256xbf16>
    %29 = vector.extract_strided_slice %1 {offsets = [0, 2], sizes = [16, 256], strides = [1, 1]} : vector<16x290xbf16> to vector<16x256xbf16>
    %cst_6 = arith.constant 0.000000e+00 : bf16
    %30 = vector.shape_cast %22 : vector<1x256xi1> to vector<1x256xi1>
    %31 = vector.broadcast %30 : vector<1x256xi1> to vector<16x256xi1>
    %32 = vector.broadcast %cst_6 : bf16 to vector<16x256xbf16>
    %33 = arith.select %31, %29, %32 : vector<16x256xi1>, vector<16x256xbf16>
    %34 = vector.extract_strided_slice %1 {offsets = [0, 16], sizes = [16, 256], strides = [1, 1]} : vector<16x290xbf16> to vector<16x256xbf16>
    %cst_7 = arith.constant 0.000000e+00 : bf16
    %35 = vector.shape_cast %20 : vector<1x256xi1> to vector<1x256xi1>
    %36 = vector.broadcast %35 : vector<1x256xi1> to vector<16x256xi1>
    %37 = vector.broadcast %cst_7 : bf16 to vector<16x256xbf16>
    %38 = arith.select %36, %34, %37 : vector<16x256xi1>, vector<16x256xbf16>
    %39 = vector.extract_strided_slice %1 {offsets = [0, 17], sizes = [16, 256], strides = [1, 1]} : vector<16x290xbf16> to vector<16x256xbf16>
    %40 = vector.extract_strided_slice %1 {offsets = [0, 18], sizes = [16, 256], strides = [1, 1]} : vector<16x290xbf16> to vector<16x256xbf16>
    %cst_8 = arith.constant 0.000000e+00 : bf16
    %41 = vector.shape_cast %22 : vector<1x256xi1> to vector<1x256xi1>
    %42 = vector.broadcast %41 : vector<1x256xi1> to vector<16x256xi1>
    %43 = vector.broadcast %cst_8 : bf16 to vector<16x256xbf16>
    %44 = arith.select %42, %40, %43 : vector<16x256xi1>, vector<16x256xbf16>
    %45 = vector.extract_strided_slice %1 {offsets = [0, 32], sizes = [16, 256], strides = [1, 1]} : vector<16x290xbf16> to vector<16x256xbf16>
    %cst_9 = arith.constant 0.000000e+00 : bf16
    %46 = vector.shape_cast %20 : vector<1x256xi1> to vector<1x256xi1>
    %47 = vector.broadcast %46 : vector<1x256xi1> to vector<16x256xi1>
    %48 = vector.broadcast %cst_9 : bf16 to vector<16x256xbf16>
    %49 = arith.select %47, %45, %48 : vector<16x256xi1>, vector<16x256xbf16>
    %50 = vector.extract_strided_slice %1 {offsets = [0, 33], sizes = [16, 256], strides = [1, 1]} : vector<16x290xbf16> to vector<16x256xbf16>
    %51 = vector.extract_strided_slice %1 {offsets = [0, 34], sizes = [16, 256], strides = [1, 1]} : vector<16x290xbf16> to vector<16x256xbf16>
    %cst_10 = arith.constant 0.000000e+00 : bf16
    %52 = vector.shape_cast %22 : vector<1x256xi1> to vector<1x256xi1>
    %53 = vector.broadcast %52 : vector<1x256xi1> to vector<16x256xi1>
    %54 = vector.broadcast %cst_10 : bf16 to vector<16x256xbf16>
    %55 = arith.select %53, %51, %54 : vector<16x256xi1>, vector<16x256xbf16>
    %56 = tpu.concatenate %27, %28, %33, %38, %39, %44, %49, %50, %55 in 0 : vector<16x256xbf16>, vector<16x256xbf16>, vector<16x256xbf16>, vector<16x256xbf16>, vector<16x256xbf16>, vector<16x256xbf16>, vector<16x256xbf16>, vector<16x256xbf16>, vector<16x256xbf16> -> vector<144x256xbf16>
    %c0_11 = arith.constant 0 : index
    %c0_12 = arith.constant 0 : index
    %57 = vector.load %arg2[%c0_11, %c0_12] : memref<64x144xbf16, #tpu.memory_space<vmem>>, vector<64x144xbf16>
    %cst_13 = arith.constant dense<0.000000e+00> : vector<64x256xf32>
    %58 = tpu.matmul %57, %56, %cst_13 {dimension_numbers = #tpu.dot_dimension_numbers<[1], [0], [0], [1], [0, 0, 1, 1], [], []>} : vector<64x144xbf16>, vector<144x256xbf16>, vector<64x256xf32> -> vector<64x256xf32>
    %cst_14 = arith.constant dense<0.000000e+00> : vector<64xf32>
    %59 = vector.multi_reduction <add>, %58, %cst_14 [1] : vector<64x256xf32> to vector<64xf32>
    %60 = vector.shape_cast %59 : vector<64xf32> to vector<64x1xf32>
    %61 = arith.mulf %58, %58 : vector<64x256xf32>
    %cst_15 = arith.constant dense<0.000000e+00> : vector<64xf32>
    %62 = vector.multi_reduction <add>, %61, %cst_15 [1] : vector<64x256xf32> to vector<64xf32>
    %63 = vector.shape_cast %62 : vector<64xf32> to vector<64x1xf32>
    %c0_16 = arith.constant 0 : index
    %c0_17 = arith.constant 0 : index
    %64 = vector.load %arg5[%c0_16, %c0_17] : memref<64x64xf32, #tpu.memory_space<vmem>>, vector<64x64xf32>
    %cst_18 = arith.constant dense<0.000000e+00> : vector<64x1xf32>
    %65 = tpu.matmul %64, %60, %cst_18 {dimension_numbers = #tpu.dot_dimension_numbers<[1], [0], [0], [1], [0, 0, 1, 1], [], []>} : vector<64x64xf32>, vector<64x1xf32>, vector<64x1xf32> -> vector<64x1xf32>
    %c0_19 = arith.constant 0 : index
    %c0_20 = arith.constant 0 : index
    %66 = vector.load %arg5[%c0_19, %c0_20] : memref<64x64xf32, #tpu.memory_space<vmem>>, vector<64x64xf32>
    %cst_21 = arith.constant dense<0.000000e+00> : vector<64x1xf32>
    %67 = tpu.matmul %66, %63, %cst_21 {dimension_numbers = #tpu.dot_dimension_numbers<[1], [0], [0], [1], [0, 0, 1, 1], [], []>} : vector<64x64xf32>, vector<64x1xf32>, vector<64x1xf32> -> vector<64x1xf32>
    %68 = arith.mulf %65, %65 : vector<64x1xf32>
    %69 = arith.subf %67, %68 : vector<64x1xf32>
    %cst_22 = arith.constant 9.99999974E-6 : f32
    %70 = vector.broadcast %cst_22 : f32 to vector<64x1xf32>
    %71 = arith.addf %69, %70 : vector<64x1xf32>
    %72 = math.rsqrt %71 : vector<64x1xf32>
    %73 = vector.broadcast %65 : vector<64x1xf32> to vector<64x256xf32>
    %74 = arith.subf %58, %73 : vector<64x256xf32>
    %c0_23 = arith.constant 0 : index
    %c0_24 = arith.constant 0 : index
    %75 = vector.load %arg3[%c0_23, %c0_24] : memref<64x1xf32, #tpu.memory_space<vmem>>, vector<64x1xf32>
    %76 = arith.mulf %72, %75 : vector<64x1xf32>
    %77 = vector.broadcast %76 : vector<64x1xf32> to vector<64x256xf32>
    %78 = arith.mulf %74, %77 : vector<64x256xf32>
    %c0_25 = arith.constant 0 : index
    %c0_26 = arith.constant 0 : index
    %79 = vector.load %arg4[%c0_25, %c0_26] : memref<64x1xf32, #tpu.memory_space<vmem>>, vector<64x1xf32>
    %80 = vector.broadcast %79 : vector<64x1xf32> to vector<64x256xf32>
    %81 = arith.addf %78, %80 : vector<64x256xf32>
    %cst_27 = arith.constant 0.000000e+00 : f32
    %82 = vector.broadcast %cst_27 : f32 to vector<64x256xf32>
    %83 = arith.maximumf %81, %82 : vector<64x256xf32>
    %c0_28 = arith.constant 0 : index
    %c0_29 = arith.constant 0 : index
    %c0_30 = arith.constant 0 : index
    %84 = vector.load %arg6[%c0_28, %c0_29, %c0_30] : memref<1x64x256xf32, #tpu.memory_space<vmem>>, vector<1x64x256xf32>
    %85 = vector.shape_cast %84 : vector<1x64x256xf32> to vector<64x256xf32>
    %86 = vector.shape_cast %83 : vector<64x256xf32> to vector<1x64x256xf32>
    tpu.vector_store %arg6[%c0_28, %c0_29, %c0_30], %86 {strides = array<i32>} : memref<1x64x256xf32, #tpu.memory_space<vmem>>, vector<1x64x256xf32>,
    return
  }
  func.func @transform_0(%arg0: i32) -> (i32, i32, i32) {
    %c0_i32 = arith.constant 0 : i32
    %c0_i32_0 = arith.constant 0 : i32
    %c0_i32_1 = arith.constant 0 : i32
    return %arg0, %c0_i32, %c0_i32_0 : i32, i32, i32
  }
  func.func @transform_1(%arg0: i32) -> (i32, i32) {
    %c0_i32 = arith.constant 0 : i32
    %c0_i32_0 = arith.constant 0 : i32
    %c0_i32_1 = arith.constant 0 : i32
    return %c0_i32, %c0_i32_0 : i32, i32
  }
  func.func @transform_2(%arg0: i32) -> (i32, i32) {
    %c0_i32 = arith.constant 0 : i32
    %c0_i32_0 = arith.constant 0 : i32
    %c0_i32_1 = arith.constant 0 : i32
    return %c0_i32, %c0_i32_0 : i32, i32
  }
  func.func @transform_3(%arg0: i32) -> (i32, i32) {
    %c0_i32 = arith.constant 0 : i32
    %c0_i32_0 = arith.constant 0 : i32
    %c0_i32_1 = arith.constant 0 : i32
    return %c0_i32, %c0_i32_0 : i32, i32
  }
  func.func @transform_4(%arg0: i32) -> (i32, i32) {
    %c0_i32 = arith.constant 0 : i32
    %c0_i32_0 = arith.constant 0 : i32
    %c0_i32_1 = arith.constant 0 : i32
    return %c0_i32, %c0_i32_0 : i32, i32
  }
  func.func @transform_5(%arg0: i32) -> (i32, i32, i32) {
    %c0_i32 = arith.constant 0 : i32
    %c0_i32_0 = arith.constant 0 : i32
    %c0_i32_1 = arith.constant 0 : i32
    return %arg0, %c0_i32, %c0_i32_0 : i32, i32, i32
  }
}

</mosaic_0001>

<llo_original>
// kernel: tpu_custom_call.1
$region0: #{tpu_custom_call.1}
  #allocation0 [shape = 'u32[]', space=smem, size = 0x4, offset = 0x4, fixed_abs, tag = 'smem constant byte address 0x4 - core index']
  #allocation1 [shape = 'u32[144,128]{1,0:T(1,128)}', space=vmem, size = 0x12000, scoped, tag = 'internal scratch']
  %s0 = inlined_call_operand.hbm [shape: bf16[2,16,290], index: 0, kind: input, shape index: {}]
  %s1 = inlined_call_operand.vmem [shape: bf16[64,144], index: 1, kind: input, shape index: {}]
  %s2 = inlined_call_operand.vmem [shape: f32[64,1], index: 2, kind: input, shape index: {}]
  %s3 = inlined_call_operand.vmem [shape: f32[64,1], index: 3, kind: input, shape index: {}]
  %s4 = inlined_call_operand.vmem [shape: f32[64,64], index: 4, kind: input, shape index: {}]
  %s5 = inlined_call_operand.hbm [shape: f32[2,64,256], index: 5, kind: output, shape index: {}]
  %s6 = sld [smem:[#allocation0]]
  $region57: #{tpu_custom_call.1} parent=0
    _
  %s8 = ssub.s32 1, %s6
  %s9 = scalar_select 0, %s8, %s6
  $region1: #{tpu_custom_call.1} parent=0
    #allocation2 [shape = 'u8[24576]{0}', space=vmem, size = 0x6000, scoped, tag = 'input window, operand 0']
    #allocation3 [shape = 's32[2]{0}', space=sflag, size = 0x8, scoped, tag = 'scoped memory for tpu_custom_call.1']
    #allocation4 [shape = 's32[2]{0}', space=sflag, size = 0x8, scoped, tag = 'scoped memory for tpu_custom_call.1']
    #allocation5 [shape = 'u8[131072]{0}', space=vmem, size = 0x20000, scoped, tag = 'output window, operand 0']
    %10 = vsyncpa [#allocation3], 0
    %s11 = scalar_lea.sflag [#allocation3], 1
    %12 = vsyncpa %s11, 0
    %13 = vsyncpa [#allocation4], 0
    %s14 = scalar_lea.sflag [#allocation4], 1
    %15 = vsyncpa %s14, 0
    loop: start=0, step=1, limit=4
    $region2: #{tpu_custom_call.1} parent=1 // loop_pre_header
      _
    $region3: #{tpu_custom_call.1} parent=1 // loop_header
      %s17 = sphi 0, %s21
      %p18 = scmp.ge.s32.totalorder %s17, 4
      %s27 = sphi 0, %s29
      %s30 = sphi 0, %s27
      %s31 = sphi 0, %s30
      %s47 = sphi 0, %s31
      %s51 = sphi 0, %s51
      %s53 = sphi 0, %s51
      %s54 = sphi 0, %s53
      %s68 = sphi 0, %s54
      %s72 = sphi 0, %s72
      %s74 = sphi 0, %s72
      %s75 = sphi 0, %s74
      %s89 = sphi 0, %s75
      %s93 = sphi 0, %s93
      %s95 = sphi 0, %s93
      %s96 = sphi 0, %s95
      %s110 = sphi 0, %s96
      %s114 = sphi 0, %s114
      %s116 = sphi 0, %s114
      %s117 = sphi 0, %s116
      %s131 = sphi 0, %s117
      %s137 = sphi 0, %s139
      %s140 = sphi 0, %s137
      %s141 = sphi 0, %s140
      %s157 = sphi 0, %s141
    $region4: #{tpu_custom_call.1} parent=1 // loop_header_branch
      %20 = sbr.rel (%p18) target = $region8
    $region5: #{tpu_custom_call.1} parent=1 // loop_body
      %s22 = ssub.s32 %s17, 1
      %s23 = ssub.s32 %s17, 2
      %s24 = sadd.s32 %s17, 1
      %s25 = ssub.s32 %s17, %s24
      %p26 = scmp.eq.s32.totalorder %s25, 0
      %s28 = sadd.s32 %s27, 1
      %s29 = scalar_select %p26, %s27, %s28
      %p32 = pneg %p26
      %p33 = scmp.eq.s32.totalorder %s17, 1
      %p34 = por %p32, %p33
      %p35 = scmp.ne.s32.totalorder %s27, %s30
      %p36 = scmp.eq.s32.totalorder %s17, 0
      %p37 = por %p35, %p36
      %p38 = scmp.ne.s32.totalorder %s27, %s30
      %p39 = scmp.eq.s32.totalorder %s22, 1
      %p40 = por %p38, %p39
      %p41 = scmp.ne.s32.totalorder %s30, %s31
      %p42 = scmp.eq.s32.totalorder %s22, 0
      %p43 = por %p41, %p42
      %p44 = scmp.ne.s32.totalorder %s30, %s31
      %p45 = scmp.eq.s32.totalorder %s23, 1
      %p46 = por %p44, %p45
      %p48 = scmp.ne.s32.totalorder %s31, %s47
      %p49 = scmp.eq.s32.totalorder %s23, 0
      %p50 = por %p48, %p49
      %s52 = sadd.s32 %s51, 1
      %p55 = scmp.eq.s32.totalorder %s17, 1
      %p56 = scmp.ne.s32.totalorder %s51, %s53
      %p57 = scmp.eq.s32.totalorder %s17, 0
      %p58 = por %p56, %p57
      %p59 = scmp.ne.s32.totalorder %s51, %s53
      %p60 = scmp.eq.s32.totalorder %s22, 1
      %p61 = por %p59, %p60
      %p62 = scmp.ne.s32.totalorder %s53, %s54
      %p63 = scmp.eq.s32.totalorder %s22, 0
      %p64 = por %p62, %p63
      %p65 = scmp.ne.s32.totalorder %s53, %s54
      %p66 = scmp.eq.s32.totalorder %s23, 1
      %p67 = por %p65, %p66
      %p69 = scmp.ne.s32.totalorder %s54, %s68
      %p70 = scmp.eq.s32.totalorder %s23, 0
      %p71 = por %p69, %p70
      %s73 = sadd.s32 %s72, 1
      %p76 = scmp.eq.s32.totalorder %s17, 1
      %p77 = scmp.ne.s32.totalorder %s72, %s74
      %p78 = scmp.eq.s32.totalorder %s17, 0
      %p79 = por %p77, %p78
      %p80 = scmp.ne.s32.totalorder %s72, %s74
      %p81 = scmp.eq.s32.totalorder %s22, 1
      %p82 = por %p80, %p81
      %p83 = scmp.ne.s32.totalorder %s74, %s75
      %p84 = scmp.eq.s32.totalorder %s22, 0
      %p85 = por %p83, %p84
      %p86 = scmp.ne.s32.totalorder %s74, %s75
      %p87 = scmp.eq.s32.totalorder %s23, 1
      %p88 = por %p86, %p87
      %p90 = scmp.ne.s32.totalorder %s75, %s89
      %p91 = scmp.eq.s32.totalorder %s23, 0
      %p92 = por %p90, %p91
      %s94 = sadd.s32 %s93, 1
      %p97 = scmp.eq.s32.totalorder %s17, 1
      %p98 = scmp.ne.s32.totalorder %s93, %s95
      %p99 = scmp.eq.s32.totalorder %s17, 0
      %p100 = por %p98, %p99
      %p101 = scmp.ne.s32.totalorder %s93, %s95
      %p102 = scmp.eq.s32.totalorder %s22, 1
      %p103 = por %p101, %p102
      %p104 = scmp.ne.s32.totalorder %s95, %s96
      %p105 = scmp.eq.s32.totalorder %s22, 0
      %p106 = por %p104, %p105
      %p107 = scmp.ne.s32.totalorder %s95, %s96
      %p108 = scmp.eq.s32.totalorder %s23, 1
      %p109 = por %p107, %p108
      %p111 = scmp.ne.s32.totalorder %s96, %s110
      %p112 = scmp.eq.s32.totalorder %s23, 0
      %p113 = por %p111, %p112
      %s115 = sadd.s32 %s114, 1
      %p118 = scmp.eq.s32.totalorder %s17, 1
      %p119 = scmp.ne.s32.totalorder %s114, %s116
      %p120 = scmp.eq.s32.totalorder %s17, 0
      %p121 = por %p119, %p120
      %p122 = scmp.ne.s32.totalorder %s114, %s116
      %p123 = scmp.eq.s32.totalorder %s22, 1
      %p124 = por %p122, %p123
      %p125 = scmp.ne.s32.totalorder %s116, %s117
      %p126 = scmp.eq.s32.totalorder %s22, 0
      %p127 = por %p125, %p126
      %p128 = scmp.ne.s32.totalorder %s116, %s117
      %p129 = scmp.eq.s32.totalorder %s23, 1
      %p130 = por %p128, %p129
      %p132 = scmp.ne.s32.totalorder %s117, %s131
      %p133 = scmp.eq.s32.totalorder %s23, 0
      %p134 = por %p132, %p133
      %s135 = ssub.s32 %s17, %s24
      %p136 = scmp.eq.s32.totalorder %s135, 0
      %s138 = sadd.s32 %s137, 1
      %s139 = scalar_select %p136, %s137, %s138
      %p142 = pneg %p136
      %p143 = scmp.eq.s32.totalorder %s17, 1
      %p144 = por %p142, %p143
      %p145 = scmp.ne.s32.totalorder %s137, %s140
      %p146 = scmp.eq.s32.totalorder %s17, 0
      %p147 = por %p145, %p146
      %p148 = scmp.ne.s32.totalorder %s137, %s140
      %p149 = scmp.eq.s32.totalorder %s22, 1
      %p150 = por %p148, %p149
      %p151 = scmp.ne.s32.totalorder %s140, %s141
      %p152 = scmp.eq.s32.totalorder %s22, 0
      %p153 = por %p151, %p152
      %p154 = scmp.ne.s32.totalorder %s140, %s141
      %p155 = scmp.eq.s32.totalorder %s23, 1
      %p156 = por %p154, %p155
      %p158 = scmp.ne.s32.totalorder %s141, %s157
      %p159 = scmp.eq.s32.totalorder %s23, 0
      %p160 = por %p158, %p159
      %p161 = scmp.le.s32.totalorder 1, %s17
      %p162 = scmp.lt.s32.totalorder %s17, 3
      %p163 = pnand %p161, %p162
      %p164 = pneg %p163
      // Predicated region
      $region9: #{tpu_custom_call.1} parent=5 // pred_check
        _
      $region10: #{tpu_custom_call.1} parent=5 // pred_check_branch
        %166 = sbr.rel (%p163) target = $region12
      $region11: #{tpu_custom_call.1} parent=5 // pred_region
        %s167 = ssub.s32 %s17, 1
        // Predicated region
        $region13: #{tpu_custom_call.1} parent=11 // pred_check
          %p168 = pneg %p64
        $region14: #{tpu_custom_call.1} parent=11 // pred_check_branch
          %170 = sbr.rel (%p168) target = $region16
        $region15: #{tpu_custom_call.1} parent=11 // pred_region
          _
        $region16: #{tpu_custom_call.1} parent=11 // pred_fallthru
          _
        // Predicated region
        $region17: #{tpu_custom_call.1} parent=11 // pred_check
          %p171 = pneg %p85
        $region18: #{tpu_custom_call.1} parent=11 // pred_check_branch
          %173 = sbr.rel (%p171) target = $region20
        $region19: #{tpu_custom_call.1} parent=11 // pred_region
          _
        $region20: #{tpu_custom_call.1} parent=11 // pred_fallthru
          _
        // Predicated region
        $region21: #{tpu_custom_call.1} parent=11 // pred_check
          %p174 = pneg %p106
        $region22: #{tpu_custom_call.1} parent=11 // pred_check_branch
          %176 = sbr.rel (%p174) target = $region24
        $region23: #{tpu_custom_call.1} parent=11 // pred_region
          _
        $region24: #{tpu_custom_call.1} parent=11 // pred_fallthru
          _
        // Predicated region
        $region25: #{tpu_custom_call.1} parent=11 // pred_check
          %p177 = pneg %p127
        $region26: #{tpu_custom_call.1} parent=11 // pred_check_branch
          %179 = sbr.rel (%p177) target = $region28
        $region27: #{tpu_custom_call.1} parent=11 // pred_region
          _
        $region28: #{tpu_custom_call.1} parent=11 // pred_fallthru
          _
      $region12: #{tpu_custom_call.1} parent=5 // pred_fallthru
        _
      %p180 = scmp.lt.s32.totalorder %s17, 2
      // Predicated region
      $region29: #{tpu_custom_call.1} parent=5 // pred_check
        %p181 = pneg %p180
      $region30: #{tpu_custom_call.1} parent=5 // pred_check_branch
        %183 = sbr.rel (%p181) target = $region32
      $region31: #{tpu_custom_call.1} parent=5 // pred_region
        // Predicated region
        $region33: #{tpu_custom_call.1} parent=31 // pred_check
          %p184 = pneg %p37
        $region34: #{tpu_custom_call.1} parent=31 // pred_check_branch
          %186 = sbr.rel (%p184) target = $region36
        $region35: #{tpu_custom_call.1} parent=31 // pred_region
          %s187 = sand.u32 %s27, 1
          %s188 = scalar_lea.sflag [#allocation3], %s187
          %s189 = sand.u32 %s27, 1
          %s190 = smul.addr %s189, 24
          %s191 = scalar_lea.vmem [#allocation2], %s190
          %s193 = ssub.s32 384, 384
          %194 = vsyncadd %s188, %s193
          %s195 = smul.addr %s17, 6
          %s196 = smul.addr %s195, 64
          %s197 = scalar_lea.hbm %s0, %s196
          %s198 = sshll.u32 %s191, 4
          %s199 = int_to_ptr.vmem [resolvable:$true] %s198
          %204 = dma.hbm_to_vmem [thread:$0]  %s197, 384, %s199, %s188, 192, 192, 12
        $region36: #{tpu_custom_call.1} parent=31 // pred_fallthru
          _
      $region32: #{tpu_custom_call.1} parent=5 // pred_fallthru
        _
      %p205 = scmp.le.s32.totalorder 1, %s17
      %p206 = scmp.lt.s32.totalorder %s17, 3
      %p207 = pnand %p205, %p206
      %p208 = pneg %p207
      // Predicated region
      $region37: #{tpu_custom_call.1} parent=5 // pred_check
        _
      $region38: #{tpu_custom_call.1} parent=5 // pred_check_branch
        %210 = sbr.rel (%p207) target = $region40
      $region39: #{tpu_custom_call.1} parent=5 // pred_region
        %s211 = ssub.s32 %s17, 1
        %s212 = sand.u32 %s30, 1
        %s213 = scalar_lea.sflag [#allocation3], %s212
        %s214 = sand.u32 %s30, 1
        %s215 = smul.addr %s214, 24
        %s216 = scalar_lea.vmem [#allocation2], %s215
        // Predicated region
        $region41: #{tpu_custom_call.1} parent=39 // pred_check
          %p217 = pneg %p43
        $region42: #{tpu_custom_call.1} parent=39 // pred_check_branch
          %219 = sbr.rel (%p217) target = $region44
        $region43: #{tpu_custom_call.1} parent=39 // pred_region
          %220 = dma.done %s213, 384
        $region44: #{tpu_custom_call.1} parent=39 // pred_fallthru
          _
        %s221 = sand.u32 %s30, 1
        %s222 = scalar_lea.sflag [#allocation3], %s221
        %s223 = sand.u32 %s30, 1
        %s224 = smul.addr %s223, 24
        %s225 = scalar_lea.vmem [#allocation2], %s224
        %p226 = pneg %p43
        %p227 = pneg %p40
        %p228 = pneg %p64
        %p229 = pneg %p61
        %p230 = pneg %p85
        %p231 = pneg %p82
        %p232 = pneg %p106
        %p233 = pneg %p103
        %p234 = pneg %p127
        %p235 = pneg %p124
        %p236 = pneg %p153
        %p237 = pneg %p150
        %s238 = sand.u32 %s140, 1
        %s239 = scalar_lea.sflag [#allocation4], %s238
        %s240 = sand.u32 %s140, 1
        %s241 = smul.addr %s240, 128
        %s242 = scalar_lea.vmem [#allocation5], %s241
        %v246 = vld [vmem:[%s216] sm:$0xff]
        %v247 = vld [vmem:[%s216 + $0x8] sm:$0xf]
        %v248 = vld [vmem:[%s216 + $0xc] sm:$0xff]
        %v249 = vld [vmem:[%s216 + $0x14] sm:$0xf]
        %v250 = vlaneseq
        %v251 = vand.u32 %v250, 127
        %v252 = vadd.s32 %v251, 128
        %vm253 = vcmp.lt.s32.totalorder %v251, 0
        %v254 = vsub.s32 0, %v251
        %v255 = vsel %vm253, %v254, %v251
        %v256 = vshrl.u32 %v255, 4
        %v257 = vand.u32 %v255, 15
        %v258 = vsub.s32 0, %v257
        %v259 = vsel %vm253, %v258, %v257
        %vm260 = vcmp.lt.s32.totalorder %v252, 0
        %v261 = vsub.s32 0, %v252
        %v262 = vsel %vm260, %v261, %v252
        %v263 = vshrl.u32 %v262, 4
        %v264 = vand.u32 %v262, 15
        %v265 = vsub.s32 0, %v264
        %v266 = vsel %vm260, %v265, %v264
        %vm267 = vcmp.ne.s32.totalorder %v259, 0
        %vm268 = vcmp.ne.s32.totalorder %v266, 0
        %vm269 = vcmp.lt.s32.totalorder %v259, 0
        %vm270 = vcmp.lt.s32.totalorder %v266, 0
        %vm271 = vmand %vm269, %vm267
        %vm272 = vmand %vm270, %vm268
        %v273 = vadd.s32 %v259, 16
        %v274 = vadd.s32 %v266, 16
        %v275 = vsel %vm271, %v273, %v259
        %v276 = vsel %vm272, %v274, %v266
        %vm277 = vcmp.ne.s32.totalorder %v275, 0
        %vm278 = vcmp.ne.s32.totalorder %v276, 0
        %vm279 = vcmp.ne.s32.totalorder %v275, 15
        %vm280 = vcmp.ne.s32.totalorder %v276, 15
        %v281 = vsel %vm277, 1, 0
        %v282 = vsel %vm278, 1, 0
        %vm283 = vcmp.eq.s32.totalorder %v281, 1
        %vm284 = vcmp.eq.s32.totalorder %v282, 1
        %vm285 = vmpackc.low %vm284, %vm283
        %v286 = vsel %vm285, %v246, 0
        %v287 = vsel %vm285, %v248, 0
        %v288 = vsel %vm279, 1, 0
        %v289 = vsel %vm280, 1, 0
        %vm290 = vcmp.eq.s32.totalorder %v288, 1
        %vm291 = vcmp.eq.s32.totalorder %v289, 1
        %vm292 = vmpackc.low %vm291, %vm290
        %v293 = vsel %vm292, 65537, 0
        %294 = vrot.lane.b32.xlu0 %v293, 2
        %v295 = vpop.permute.xlu0 %294
        %v296 = vrot.slane %v295, 4
        %vm297 = vcmask 15360
        %v298 = vsel %vm297, %v296, %v295
        %vm299 = vcmp.ne.s16.totalorder %v298, 0
        %vm300 = vcmp.ne.s16.totalorder %v296, 0
        %v301 = vsel %vm299, %v246, 0
        %v302 = vsel %vm300, %v247, 0
        %v303 = vsel %vm299, %v248, 0
        %v304 = vsel %vm300, %v249, 0
        %v305 = vsel %vm285, 65537, 0
        %306 = vrot.lane.b32.xlu0 %v305, 16
        %v307 = vpop.permute.xlu0 %306
        %v308 = vrot.slane %v307, 4
        %vm309 = vcmask 130048
        %v310 = vsel %vm309, %v308, %v307
        %vm311 = vcmp.ne.s16.totalorder %v310, 0
        %vm312 = vcmp.ne.s16.totalorder %v308, 0
        %v313 = vsel %vm311, %v246, 0
        %v314 = vsel %vm312, %v247, 0
        %v315 = vsel %vm311, %v248, 0
        %v316 = vsel %vm312, %v249, 0
        %317 = vrot.lane.b32.xlu0 %v293, 18
        %v318 = vpop.permute.xlu0 %317
        %v319 = vrot.slane %v318, 4
        %vm320 = vcmask 146432
        %v321 = vsel %vm320, %v319, %v318
        %vm322 = vcmp.ne.s16.totalorder %v321, 0
        %vm323 = vcmp.ne.s16.totalorder %v319, 0
        %v324 = vsel %vm322, %v246, 0
        %v325 = vsel %vm323, %v247, 0
        %v326 = vsel %vm322, %v248, 0
        %v327 = vsel %vm323, %v249, 0
        %328 = vrot.lane.b32.xlu0 %v305, 32
        %v329 = vpop.permute.xlu0 %328
        %v330 = vrot.slane %v329, 4
        %vm331 = vcmask 261120
        %v332 = vsel %vm331, %v330, %v329
        %vm333 = vcmp.ne.s16.totalorder %v332, 0
        %vm334 = vcmp.ne.s16.totalorder %v330, 0
        %v335 = vsel %vm333, %v246, 0
        %v336 = vsel %vm334, %v247, 0
        %v337 = vsel %vm333, %v248, 0
        %v338 = vsel %vm334, %v249, 0
        %339 = vrot.lane.b32.xlu0 %v293, 34
        %v340 = vpop.permute.xlu0 %339
        %v341 = vrot.slane %v340, 4
        %vm342 = vcmask 277504
        %v343 = vsel %vm342, %v341, %v340
        %vm344 = vcmp.ne.s16.totalorder %v343, 0
        %vm345 = vcmp.ne.s16.totalorder %v341, 0
        %v346 = vsel %vm344, %v246, 0
        %v347 = vsel %vm345, %v247, 0
        %v348 = vsel %vm344, %v248, 0
        %v349 = vsel %vm345, %v249, 0
        %v352 = vunpack.c.l.b16 %v286
        %v353 = vunpack.c.h.b16 %v286
        %v354 = vunpack.c.l.b16 %v287
        %v355 = vunpack.c.h.b16 %v287
        %v356 = vpack.c.b16 %v354, %v352
        %v357 = vpack.c.b16 %v355, %v353
        %v364 = vunpack.c.l.b16 %v246
        %v365 = vunpack.c.h.b16 %v246
        %v366 = vunpack.c.l.b16 %v247
        %v367 = vunpack.c.l.b16 %v248
        %v368 = vunpack.c.h.b16 %v248
        %v369 = vunpack.c.l.b16 %v249
        %v370 = vpack.c.b16 %v367, %v364
        %v371 = vpack.c.b16 %v368, %v365
        %v372 = vpack.c.b16 %v369, %v366
        %373 = vrot.lane.b32.xlu0 %v370, 127
        %v374 = vpop.permute.xlu0 %373
        %375 = vrot.lane.b32.xlu0 %v371, 127
        %v376 = vpop.permute.xlu0 %375
        %377 = vrot.lane.b32.xlu0 %v372, 127
        %v378 = vpop.permute.xlu0 %377
        %vm379 = vcmask 1039360
        %v380 = vsel %vm379, %v374, %v376
        %v381 = vsel %vm379, %v376, %v378
        %v388 = vunpack.c.l.b16 %v301
        %v389 = vunpack.c.h.b16 %v301
        %v390 = vunpack.c.l.b16 %v302
        %v391 = vunpack.c.l.b16 %v303
        %v392 = vunpack.c.h.b16 %v303
        %v393 = vunpack.c.l.b16 %v304
        %v394 = vpack.c.b16 %v391, %v388
        %v395 = vpack.c.b16 %v392, %v389
        %v396 = vpack.c.b16 %v393, %v390
        %397 = vrot.lane.b32.xlu0 %v394, 126
        %v398 = vpop.permute.xlu0 %397
        %399 = vrot.lane.b32.xlu0 %v395, 126
        %v400 = vpop.permute.xlu0 %399
        %401 = vrot.lane.b32.xlu0 %v396, 126
        %v402 = vpop.permute.xlu0 %401
        %vm403 = vcmask 1031168
        %v404 = vsel %vm403, %v398, %v400
        %v405 = vsel %vm403, %v400, %v402
        %v412 = vunpack.c.l.b16 %v313
        %v413 = vunpack.c.h.b16 %v313
        %v414 = vunpack.c.l.b16 %v314
        %v415 = vunpack.c.l.b16 %v315
        %v416 = vunpack.c.h.b16 %v315
        %v417 = vunpack.c.l.b16 %v316
        %v418 = vpack.c.b16 %v415, %v412
        %v419 = vpack.c.b16 %v416, %v413
        %v420 = vpack.c.b16 %v417, %v414
        %421 = vrot.lane.b32.xlu0 %v418, 112
        %v422 = vpop.permute.xlu0 %421
        %423 = vrot.lane.b32.xlu0 %v419, 112
        %v424 = vpop.permute.xlu0 %423
        %425 = vrot.lane.b32.xlu0 %v420, 112
        %v426 = vpop.permute.xlu0 %425
        %vm427 = vcmask 916480
        %v428 = vsel %vm427, %v422, %v424
        %v429 = vsel %vm427, %v424, %v426
        %432 = vrot.lane.b32.xlu0 %v370, 111
        %v433 = vpop.permute.xlu0 %432
        %434 = vrot.lane.b32.xlu0 %v371, 111
        %v435 = vpop.permute.xlu0 %434
        %436 = vrot.lane.b32.xlu0 %v372, 111
        %v437 = vpop.permute.xlu0 %436
        %vm438 = vcmask 908288
        %v439 = vsel %vm438, %v433, %v435
        %v440 = vsel %vm438, %v435, %v437
        %v447 = vunpack.c.l.b16 %v324
        %v448 = vunpack.c.h.b16 %v324
        %v449 = vunpack.c.l.b16 %v325
        %v450 = vunpack.c.l.b16 %v326
        %v451 = vunpack.c.h.b16 %v326
        %v452 = vunpack.c.l.b16 %v327
        %v453 = vpack.c.b16 %v450, %v447
        %v454 = vpack.c.b16 %v451, %v448
        %v455 = vpack.c.b16 %v452, %v449
        %456 = vrot.lane.b32.xlu0 %v453, 110
        %v457 = vpop.permute.xlu0 %456
        %458 = vrot.lane.b32.xlu0 %v454, 110
        %v459 = vpop.permute.xlu0 %458
        %460 = vrot.lane.b32.xlu0 %v455, 110
        %v461 = vpop.permute.xlu0 %460
        %vm462 = vcmask 900096
        %v463 = vsel %vm462, %v457, %v459
        %v464 = vsel %vm462, %v459, %v461
        %v471 = vunpack.c.l.b16 %v335
        %v472 = vunpack.c.h.b16 %v335
        %v473 = vunpack.c.l.b16 %v336
        %v474 = vunpack.c.l.b16 %v337
        %v475 = vunpack.c.h.b16 %v337
        %v476 = vunpack.c.l.b16 %v338
        %v477 = vpack.c.b16 %v474, %v471
        %v478 = vpack.c.b16 %v475, %v472
        %v479 = vpack.c.b16 %v476, %v473
        %480 = vrot.lane.b32.xlu0 %v477, 96
        %v481 = vpop.permute.xlu0 %480
        %482 = vrot.lane.b32.xlu0 %v478, 96
        %v483 = vpop.permute.xlu0 %482
        %484 = vrot.lane.b32.xlu0 %v479, 96
        %v485 = vpop.permute.xlu0 %484
        %vm486 = vcmask 785408
        %v487 = vsel %vm486, %v481, %v483
        %v488 = vsel %vm486, %v483, %v485
        %491 = vrot.lane.b32.xlu0 %v370, 95
        %v492 = vpop.permute.xlu0 %491
        %493 = vrot.lane.b32.xlu0 %v371, 95
        %v494 = vpop.permute.xlu0 %493
        %495 = vrot.lane.b32.xlu0 %v372, 95
        %v496 = vpop.permute.xlu0 %495
        %vm497 = vcmask 777216
        %v498 = vsel %vm497, %v492, %v494
        %v499 = vsel %vm497, %v494, %v496
        %v506 = vunpack.c.l.b16 %v346
        %v507 = vunpack.c.h.b16 %v346
        %v508 = vunpack.c.l.b16 %v347
        %v509 = vunpack.c.l.b16 %v348
        %v510 = vunpack.c.h.b16 %v348
        %v511 = vunpack.c.l.b16 %v349
        %v512 = vpack.c.b16 %v509, %v506
        %v513 = vpack.c.b16 %v510, %v507
        %v514 = vpack.c.b16 %v511, %v508
        %515 = vrot.lane.b32.xlu0 %v512, 94
        %v516 = vpop.permute.xlu0 %515
        %517 = vrot.lane.b32.xlu0 %v513, 94
        %v518 = vpop.permute.xlu0 %517
        %519 = vrot.lane.b32.xlu0 %v514, 94
        %v520 = vpop.permute.xlu0 %519
        %vm521 = vcmask 769024
        %v522 = vsel %vm521, %v516, %v518
        %v523 = vsel %vm521, %v518, %v520
        %v526 = vld [vmem:[%s1] sm:$0xff]
        %v527 = vld [vmem:[%s1 + $0x8] sm:$0xff]
        %v528 = vld [vmem:[%s1 + $0x10] sm:$0xff]
        %v529 = vld [vmem:[%s1 + $0x18] sm:$0xff]
        %v530 = vld [vmem:[%s1 + $0x20] sm:$0xff]
        %v531 = vld [vmem:[%s1 + $0x28] sm:$0xff]
        %v532 = vld [vmem:[%s1 + $0x30] sm:$0xff]
        %v533 = vld [vmem:[%s1 + $0x38] sm:$0xff]
        %v542 = vunpack.c.l.b16 %v526
        %v543 = vunpack.c.h.b16 %v526
        %v544 = vunpack.c.l.b16 %v527
        %v545 = vunpack.c.h.b16 %v527
        %v546 = vunpack.c.l.b16 %v528
        %v547 = vunpack.c.h.b16 %v528
        %v548 = vunpack.c.l.b16 %v529
        %v549 = vunpack.c.h.b16 %v529
        %v550 = vunpack.c.l.b16 %v530
        %v551 = vunpack.c.h.b16 %v530
        %v552 = vunpack.c.l.b16 %v531
        %v553 = vunpack.c.h.b16 %v531
        %v554 = vunpack.c.l.b16 %v532
        %v555 = vunpack.c.h.b16 %v532
        %v556 = vunpack.c.l.b16 %v533
        %v557 = vunpack.c.h.b16 %v533
        %v558 = vpack.c.b16 %v544, %v542
        %v559 = vpack.c.b16 %v545, %v543
        %v560 = vpack.c.b16 %v548, %v546
        %v561 = vpack.c.b16 %v549, %v547
        %v562 = vpack.c.b16 %v552, %v550
        %v563 = vpack.c.b16 %v553, %v551
        %v564 = vpack.c.b16 %v556, %v554
        %v565 = vpack.c.b16 %v557, %v555
        %vm570 = vcmask 130048
        %v572 = vsel %vm570, %v559, 0
        %v575 = vsel %vm570, %v561, 0
        %v578 = vsel %vm570, %v563, 0
        %v581 = vsel %vm570, %v565, 0
        %583 = vmatprep.subr.bf16.mxu0 %v357
        %584 = vmatpush1.bf16.msra.mxu0 %v356
        %585 = vmatprep.subr.bf16.mxu0 %v381
        %586 = vmatpush1.bf16.msra.mxu0 %v380
        %587 = vmatprep.subr.bf16.mxu0 %v405
        %588 = vmatpush1.bf16.msra.mxu0 %v404
        %589 = vmatprep.subr.bf16.mxu0 %v429
        %590 = vmatpush1.bf16.msra.mxu0 %v428
        %591 = vmatprep.subr.bf16.mxu0 %v440
        %592 = vmatpush1.bf16.msra.mxu0 %v439
        %593 = vmatprep.subr.bf16.mxu0 %v464
        %594 = vmatpush1.bf16.msra.mxu0 %v463
        %595 = vmatprep.subr.bf16.mxu0 %v488
        %596 = vmatpush1.bf16.msra.mxu0 %v487
        %597 = vmatprep.subr.bf16.mxu0 %v499
        %598 = vmatpush1.bf16.msra.mxu0 %v498
        %599 = vmatprep.subr.bf16.mxu0 %v523
        %600 = vmatpush1.bf16.msra.mxu0 %v522
        %601 = vmatprep.subr.bf16.mxu0 0
        %602 = vmatpush1.bf16.msra.mxu0 0
        %603 = vmatprep.subr.bf16.mxu0 0
        %604 = vmatpush1.bf16.msra.mxu0 0
        %605 = vmatprep.subr.bf16.mxu0 0
        %606 = vmatpush1.bf16.msra.mxu0 0
        %607 = vmatprep.subr.bf16.mxu0 0
        %608 = vmatpush1.bf16.msra.mxu0 0
        %609 = vmatprep.subr.bf16.mxu0 0
        %610 = vmatpush1.bf16.msra.mxu0 0
        %611 = vmatprep.subr.bf16.mxu0 0
        %612 = vmatpush1.bf16.msra.mxu0 0
        %613 = vmatprep.subr.bf16.mxu0 0
        %614 = vmatpush1.bf16.msra.mxu0 0
        %615 = vmatprep.mubr.bf16.mxu0 %v572
        %616 = vmatmul.mubr.bf16.gmra.mrb[0].mxu0 %v558
        %v617 = vpop.f32.mrb[0].mxu0
        %v618 = vadd.f32 0.0, %v617
        %v619 = vpop.f32.mrb[0].mxu0
        %v620 = vadd.f32 0.0, %v619
        %v621 = vpop.f32.mrb[0].mxu0
        %v622 = vadd.f32 0.0, %v621
        %v623 = vpop.f32.mrb[0].mxu0
        %v624 = vadd.f32 0.0, %v623
        %625 = vmatprep.mubr.bf16.mxu0 %v575
        %626 = vmatmul.mubr.bf16.gmra.mrb[0].mxu0 %v560
        %v627 = vpop.f32.mrb[0].mxu0
        %v628 = vadd.f32 0.0, %v627
        %v629 = vpop.f32.mrb[0].mxu0
        %v630 = vadd.f32 0.0, %v629
        %v631 = vpop.f32.mrb[0].mxu0
        %v632 = vadd.f32 0.0, %v631
        %v633 = vpop.f32.mrb[0].mxu0
        %v634 = vadd.f32 0.0, %v633
        %635 = vmatprep.mubr.bf16.mxu0 %v578
        %636 = vmatmul.mubr.bf16.gmra.mrb[0].mxu0 %v562
        %v637 = vpop.f32.mrb[0].mxu0
        %v638 = vadd.f32 0.0, %v637
        %v639 = vpop.f32.mrb[0].mxu0
        %v640 = vadd.f32 0.0, %v639
        %v641 = vpop.f32.mrb[0].mxu0
        %v642 = vadd.f32 0.0, %v641
        %v643 = vpop.f32.mrb[0].mxu0
        %v644 = vadd.f32 0.0, %v643
        %645 = vmatprep.mubr.bf16.mxu0 %v581
        %646 = vmatmul.mubr.bf16.gmra.mrb[0].mxu0 %v564
        %v647 = vpop.f32.mrb[0].mxu0
        %v648 = vadd.f32 0.0, %v647
        %v649 = vpop.f32.mrb[0].mxu0
        %v650 = vadd.f32 0.0, %v649
        %v651 = vpop.f32.mrb[0].mxu0
        %v652 = vadd.f32 0.0, %v651
        %v653 = vpop.f32.mrb[0].mxu0
        %v654 = vadd.f32 0.0, %v653
        %655 = vdwg.mxu0
        %v656 = vadd.f32 %v618, %v620
        %657 = vadd.xlane.f32.xlu0 %v656
        %v658 = vpop.xlane.xlu0 %657
        %v659 = vadd.f32 %v622, %v624
        %660 = vadd.xlane.f32.xlu0 %v659
        %v661 = vpop.xlane.xlu0 %660
        %v662 = vadd.f32 %v628, %v630
        %663 = vadd.xlane.f32.xlu0 %v662
        %v664 = vpop.xlane.xlu0 %663
        %v665 = vadd.f32 %v632, %v634
        %666 = vadd.xlane.f32.xlu0 %v665
        %v667 = vpop.xlane.xlu0 %666
        %v668 = vadd.f32 %v638, %v640
        %669 = vadd.xlane.f32.xlu0 %v668
        %v670 = vpop.xlane.xlu0 %669
        %v671 = vadd.f32 %v642, %v644
        %672 = vadd.xlane.f32.xlu0 %v671
        %v673 = vpop.xlane.xlu0 %672
        %v674 = vadd.f32 %v648, %v650
        %675 = vadd.xlane.f32.xlu0 %v674
        %v676 = vpop.xlane.xlu0 %675
        %v677 = vadd.f32 %v652, %v654
        %678 = vadd.xlane.f32.xlu0 %v677
        %v679 = vpop.xlane.xlu0 %678
        %v680 = vmul.f32 %v618, %v618
        %v681 = vmul.f32 %v620, %v620
        %v682 = vmul.f32 %v622, %v622
        %v683 = vmul.f32 %v624, %v624
        %v684 = vmul.f32 %v628, %v628
        %v685 = vmul.f32 %v630, %v630
        %v686 = vmul.f32 %v632, %v632
        %v687 = vmul.f32 %v634, %v634
        %v688 = vmul.f32 %v638, %v638
        %v689 = vmul.f32 %v640, %v640
        %v690 = vmul.f32 %v642, %v642
        %v691 = vmul.f32 %v644, %v644
        %v692 = vmul.f32 %v648, %v648
        %v693 = vmul.f32 %v650, %v650
        %v694 = vmul.f32 %v652, %v652
        %v695 = vmul.f32 %v654, %v654
        %v696 = vadd.f32 %v680, %v681
        %697 = vadd.xlane.f32.xlu0 %v696
        %v698 = vpop.xlane.xlu0 %697
        %v699 = vadd.f32 %v682, %v683
        %700 = vadd.xlane.f32.xlu0 %v699
        %v701 = vpop.xlane.xlu0 %700
        %v702 = vadd.f32 %v684, %v685
        %703 = vadd.xlane.f32.xlu0 %v702
        %v704 = vpop.xlane.xlu0 %703
        %v705 = vadd.f32 %v686, %v687
        %706 = vadd.xlane.f32.xlu0 %v705
        %v707 = vpop.xlane.xlu0 %706
        %v708 = vadd.f32 %v688, %v689
        %709 = vadd.xlane.f32.xlu0 %v708
        %v710 = vpop.xlane.xlu0 %709
        %v711 = vadd.f32 %v690, %v691
        %712 = vadd.xlane.f32.xlu0 %v711
        %v713 = vpop.xlane.xlu0 %712
        %v714 = vadd.f32 %v692, %v693
        %715 = vadd.xlane.f32.xlu0 %v714
        %v716 = vpop.xlane.xlu0 %715
        %v717 = vadd.f32 %v694, %v695
        %718 = vadd.xlane.f32.xlu0 %v717
        %v719 = vpop.xlane.xlu0 %718
        %v720 = vld [vmem:[%s4] sm:$0xff]
        %v721 = vld [vmem:[%s4 + $0x8] sm:$0xff]
        %v722 = vld [vmem:[%s4 + $0x10] sm:$0xff]
        %v723 = vld [vmem:[%s4 + $0x18] sm:$0xff]
        %v724 = vld [vmem:[%s4 + $0x20] sm:$0xff]
        %v725 = vld [vmem:[%s4 + $0x28] sm:$0xff]
        %v726 = vld [vmem:[%s4 + $0x30] sm:$0xff]
        %v727 = vld [vmem:[%s4 + $0x38] sm:$0xff]
        %vm728 = vcmask 523264
        %v730 = vsel %vm728, %v720, 0
        %v733 = vsel %vm728, %v721, 0
        %v736 = vsel %vm728, %v722, 0
        %v739 = vsel %vm728, %v723, 0
        %v742 = vsel %vm728, %v724, 0
        %v745 = vsel %vm728, %v725, 0
        %v748 = vsel %vm728, %v726, 0
        %v751 = vsel %vm728, %v727, 0
        %753 = vmatprep.subr.mxu0 0.0
        %754 = vmatpush1.msra.mxu0 %v658
        %755 = vmatprep.subr.mxu0 0.0
        %756 = vmatpush1.msra.mxu0 %v661
        %757 = vmatprep.subr.mxu0 0.0
        %758 = vmatpush1.msra.mxu0 %v664
        %759 = vmatprep.subr.mxu0 0.0
        %760 = vmatpush1.msra.mxu0 %v667
        %761 = vmatprep.subr.mxu0 0.0
        %762 = vmatpush1.msra.mxu0 %v670
        %763 = vmatprep.subr.mxu0 0.0
        %764 = vmatpush1.msra.mxu0 %v673
        %765 = vmatprep.subr.mxu0 0.0
        %766 = vmatpush1.msra.mxu0 %v676
        %767 = vmatprep.subr.mxu0 0.0
        %768 = vmatpush1.msra.mxu0 %v679
        %769 = vmatprep.subr.mxu0 0.0
        %770 = vmatpush1.msra.mxu0 0.0
        %771 = vmatprep.subr.mxu0 0.0
        %772 = vmatpush1.msra.mxu0 0.0
        %773 = vmatprep.subr.mxu0 0.0
        %774 = vmatpush1.msra.mxu0 0.0
        %775 = vmatprep.subr.mxu0 0.0
        %776 = vmatpush1.msra.mxu0 0.0
        %777 = vmatprep.subr.mxu0 0.0
        %778 = vmatpush1.msra.mxu0 0.0
        %779 = vmatprep.subr.mxu0 0.0
        %780 = vmatpush1.msra.mxu0 0.0
        %781 = vmatprep.subr.mxu0 0.0
        %782 = vmatpush1.msra.mxu0 0.0
        %783 = vmatprep.subr.mxu0 0.0
        %784 = vmatpush1.msra.mxu0 0.0
        %785 = vmatprep.subr.mxu0 0.0
        %786 = vmatpush1.msra.mxu0 0.0
        %787 = vmatprep.subr.mxu0 0.0
        %788 = vmatpush1.msra.mxu0 0.0
        %789 = vmatprep.subr.mxu0 0.0
        %790 = vmatpush1.msra.mxu0 0.0
        %791 = vmatprep.subr.mxu0 0.0
        %792 = vmatpush1.msra.mxu0 0.0
        %793 = vmatprep.subr.mxu0 0.0
        %794 = vmatpush1.msra.mxu0 0.0
        %795 = vmatprep.subr.mxu0 0.0
        %796 = vmatpush1.msra.mxu0 0.0
        %797 = vmatprep.subr.mxu0 0.0
        %798 = vmatpush1.msra.mxu0 0.0
        %799 = vmatprep.subr.mxu0 0.0
        %800 = vmatpush1.msra.mxu0 0.0
        %801 = vmatprep.subr.mxu0 0.0
        %802 = vmatpush1.msra.mxu0 0.0
        %803 = vmatprep.subr.mxu0 0.0
        %804 = vmatpush1.msra.mxu0 0.0
        %805 = vmatprep.subr.mxu0 0.0
        %806 = vmatpush1.msra.mxu0 0.0
        %807 = vmatprep.subr.mxu0 0.0
        %808 = vmatpush1.msra.mxu0 0.0
        %809 = vmatprep.subr.mxu0 0.0
        %810 = vmatpush1.msra.mxu0 0.0
        %811 = vmatprep.subr.mxu0 0.0
        %812 = vmatpush1.msra.mxu0 0.0
        %813 = vmatprep.subr.mxu0 0.0
        %814 = vmatpush1.msra.mxu0 0.0
        %815 = vmatprep.subr.mxu0 0.0
        %816 = vmatpush1.msra.mxu0 0.0
        %817 = vmatprep.mubr.f32.mxu0 0.0
        %818 = vmatmul.mubr.f32.gmra.mrb[0].mxu0 %v730
        %v819 = vpop.f32.mrb[0].mxu0
        %v820 = vadd.f32 0.0, %v819
        %v821 = vpop.f32.mrb[0].mxu0
        %822 = vmatprep.mubr.f32.mxu0 0.0
        %823 = vmatmul.mubr.f32.gmra.mrb[0].mxu0 %v733
        %v824 = vpop.f32.mrb[0].mxu0
        %v825 = vadd.f32 0.0, %v824
        %v826 = vpop.f32.mrb[0].mxu0
        %827 = vmatprep.mubr.f32.mxu0 0.0
        %828 = vmatmul.mubr.f32.gmra.mrb[0].mxu0 %v736
        %v829 = vpop.f32.mrb[0].mxu0
        %v830 = vadd.f32 0.0, %v829
        %v831 = vpop.f32.mrb[0].mxu0
        %832 = vmatprep.mubr.f32.mxu0 0.0
        %833 = vmatmul.mubr.f32.gmra.mrb[0].mxu0 %v739
        %v834 = vpop.f32.mrb[0].mxu0
        %v835 = vadd.f32 0.0, %v834
        %v836 = vpop.f32.mrb[0].mxu0
        %837 = vmatprep.mubr.f32.mxu0 0.0
        %838 = vmatmul.mubr.f32.gmra.mrb[0].mxu0 %v742
        %v839 = vpop.f32.mrb[0].mxu0
        %v840 = vadd.f32 0.0, %v839
        %v841 = vpop.f32.mrb[0].mxu0
        %842 = vmatprep.mubr.f32.mxu0 0.0
        %843 = vmatmul.mubr.f32.gmra.mrb[0].mxu0 %v745
        %v844 = vpop.f32.mrb[0].mxu0
        %v845 = vadd.f32 0.0, %v844
        %v846 = vpop.f32.mrb[0].mxu0
        %847 = vmatprep.mubr.f32.mxu0 0.0
        %848 = vmatmul.mubr.f32.gmra.mrb[0].mxu0 %v748
        %v849 = vpop.f32.mrb[0].mxu0
        %v850 = vadd.f32 0.0, %v849
        %v851 = vpop.f32.mrb[0].mxu0
        %852 = vmatprep.mubr.f32.mxu0 0.0
        %853 = vmatmul.mubr.f32.gmra.mrb[0].mxu0 %v751
        %v854 = vpop.f32.mrb[0].mxu0
        %v855 = vadd.f32 0.0, %v854
        %v856 = vpop.f32.mrb[0].mxu0
        %857 = vdwg.mxu0
        %858 = vmatprep.subr.mxu0 0.0
        %859 = vmatpush1.msra.mxu0 %v698
        %860 = vmatprep.subr.mxu0 0.0
        %861 = vmatpush1.msra.mxu0 %v701
        %862 = vmatprep.subr.mxu0 0.0
        %863 = vmatpush1.msra.mxu0 %v704
        %864 = vmatprep.subr.mxu0 0.0
        %865 = vmatpush1.msra.mxu0 %v707
        %866 = vmatprep.subr.mxu0 0.0
        %867 = vmatpush1.msra.mxu0 %v710
        %868 = vmatprep.subr.mxu0 0.0
        %869 = vmatpush1.msra.mxu0 %v713
        %870 = vmatprep.subr.mxu0 0.0
        %871 = vmatpush1.msra.mxu0 %v716
        %872 = vmatprep.subr.mxu0 0.0
        %873 = vmatpush1.msra.mxu0 %v719
        %874 = vmatprep.subr.mxu0 0.0
        %875 = vmatpush1.msra.mxu0 0.0
        %876 = vmatprep.subr.mxu0 0.0
        %877 = vmatpush1.msra.mxu0 0.0
        %878 = vmatprep.subr.mxu0 0.0
        %879 = vmatpush1.msra.mxu0 0.0
        %880 = vmatprep.subr.mxu0 0.0
        %881 = vmatpush1.msra.mxu0 0.0
        %882 = vmatprep.subr.mxu0 0.0
        %883 = vmatpush1.msra.mxu0 0.0
        %884 = vmatprep.subr.mxu0 0.0
        %885 = vmatpush1.msra.mxu0 0.0
        %886 = vmatprep.subr.mxu0 0.0
        %887 = vmatpush1.msra.mxu0 0.0
        %888 = vmatprep.subr.mxu0 0.0
        %889 = vmatpush1.msra.mxu0 0.0
        %890 = vmatprep.subr.mxu0 0.0
        %891 = vmatpush1.msra.mxu0 0.0
        %892 = vmatprep.subr.mxu0 0.0
        %893 = vmatpush1.msra.mxu0 0.0
        %894 = vmatprep.subr.mxu0 0.0
        %895 = vmatpush1.msra.mxu0 0.0
        %896 = vmatprep.subr.mxu0 0.0
        %897 = vmatpush1.msra.mxu0 0.0
        %898 = vmatprep.subr.mxu0 0.0
        %899 = vmatpush1.msra.mxu0 0.0
        %900 = vmatprep.subr.mxu0 0.0
        %901 = vmatpush1.msra.mxu0 0.0
        %902 = vmatprep.subr.mxu0 0.0
        %903 = vmatpush1.msra.mxu0 0.0
        %904 = vmatprep.subr.mxu0 0.0
        %905 = vmatpush1.msra.mxu0 0.0
        %906 = vmatprep.subr.mxu0 0.0
        %907 = vmatpush1.msra.mxu0 0.0
        %908 = vmatprep.subr.mxu0 0.0
        %909 = vmatpush1.msra.mxu0 0.0
        %910 = vmatprep.subr.mxu0 0.0
        %911 = vmatpush1.msra.mxu0 0.0
        %912 = vmatprep.subr.mxu0 0.0
        %913 = vmatpush1.msra.mxu0 0.0
        %914 = vmatprep.subr.mxu0 0.0
        %915 = vmatpush1.msra.mxu0 0.0
        %916 = vmatprep.subr.mxu0 0.0
        %917 = vmatpush1.msra.mxu0 0.0
        %918 = vmatprep.subr.mxu0 0.0
        %919 = vmatpush1.msra.mxu0 0.0
        %920 = vmatprep.subr.mxu0 0.0
        %921 = vmatpush1.msra.mxu0 0.0
        %922 = vmatprep.mubr.f32.mxu0 0.0
        %923 = vmatmul.mubr.f32.gmra.mrb[0].mxu0 %v730
        %v924 = vpop.f32.mrb[0].mxu0
        %v925 = vadd.f32 0.0, %v924
        %v926 = vpop.f32.mrb[0].mxu0
        %927 = vmatprep.mubr.f32.mxu0 0.0
        %928 = vmatmul.mubr.f32.gmra.mrb[0].mxu0 %v733
        %v929 = vpop.f32.mrb[0].mxu0
        %v930 = vadd.f32 0.0, %v929
        %v931 = vpop.f32.mrb[0].mxu0
        %932 = vmatprep.mubr.f32.mxu0 0.0
        %933 = vmatmul.mubr.f32.gmra.mrb[0].mxu0 %v736
        %v934 = vpop.f32.mrb[0].mxu0
        %v935 = vadd.f32 0.0, %v934
        %v936 = vpop.f32.mrb[0].mxu0
        %937 = vmatprep.mubr.f32.mxu0 0.0
        %938 = vmatmul.mubr.f32.gmra.mrb[0].mxu0 %v739
        %v939 = vpop.f32.mrb[0].mxu0
        %v940 = vadd.f32 0.0, %v939
        %v941 = vpop.f32.mrb[0].mxu0
        %942 = vmatprep.mubr.f32.mxu0 0.0
        %943 = vmatmul.mubr.f32.gmra.mrb[0].mxu0 %v742
        %v944 = vpop.f32.mrb[0].mxu0
        %v945 = vadd.f32 0.0, %v944
        %v946 = vpop.f32.mrb[0].mxu0
        %947 = vmatprep.mubr.f32.mxu0 0.0
        %948 = vmatmul.mubr.f32.gmra.mrb[0].mxu0 %v745
        %v949 = vpop.f32.mrb[0].mxu0
        %v950 = vadd.f32 0.0, %v949
        %v951 = vpop.f32.mrb[0].mxu0
        %952 = vmatprep.mubr.f32.mxu0 0.0
        %953 = vmatmul.mubr.f32.gmra.mrb[0].mxu0 %v748
        %v954 = vpop.f32.mrb[0].mxu0
        %v955 = vadd.f32 0.0, %v954
        %v956 = vpop.f32.mrb[0].mxu0
        %957 = vmatprep.mubr.f32.mxu0 0.0
        %958 = vmatmul.mubr.f32.gmra.mrb[0].mxu0 %v751
        %v959 = vpop.f32.mrb[0].mxu0
        %v960 = vadd.f32 0.0, %v959
        %v961 = vpop.f32.mrb[0].mxu0
        %962 = vdwg.mxu0
        %v963 = vmul.f32 %v820, %v820
        %v964 = vmul.f32 %v825, %v825
        %v965 = vmul.f32 %v830, %v830
        %v966 = vmul.f32 %v835, %v835
        %v967 = vmul.f32 %v840, %v840
        %v968 = vmul.f32 %v845, %v845
        %v969 = vmul.f32 %v850, %v850
        %v970 = vmul.f32 %v855, %v855
        %v971 = vsub.f32 %v925, %v963
        %v972 = vsub.f32 %v930, %v964
        %v973 = vsub.f32 %v935, %v965
        %v974 = vsub.f32 %v940, %v966
        %v975 = vsub.f32 %v945, %v967
        %v976 = vsub.f32 %v950, %v968
        %v977 = vsub.f32 %v955, %v969
        %v978 = vsub.f32 %v960, %v970
        %v979 = vadd.f32 %v971, 1e-05
        %v980 = vadd.f32 %v972, 1e-05
        %v981 = vadd.f32 %v973, 1e-05
        %v982 = vadd.f32 %v974, 1e-05
        %v983 = vadd.f32 %v975, 1e-05
        %v984 = vadd.f32 %v976, 1e-05
        %v985 = vadd.f32 %v977, 1e-05
        %v986 = vadd.f32 %v978, 1e-05
        %v987 = vrsqrt.pop %v979
        %v988 = vrsqrt.pop %v980
        %v989 = vrsqrt.pop %v981
        %v990 = vrsqrt.pop %v982
        %v991 = vrsqrt.pop %v983
        %v992 = vrsqrt.pop %v984
        %v993 = vrsqrt.pop %v985
        %v994 = vrsqrt.pop %v986
        %996 = vset.pattern.permute.xlu0 0
        %997 = vperm.xlu0 %996, %v820
        %v998 = vpop.permute.xlu0 %997
        %1001 = vset.pattern.permute.xlu0 0
        %1002 = vperm.xlu0 %1001, %v825
        %v1003 = vpop.permute.xlu0 %1002
        %1006 = vset.pattern.permute.xlu0 0
        %1007 = vperm.xlu0 %1006, %v830
        %v1008 = vpop.permute.xlu0 %1007
        %1011 = vset.pattern.permute.xlu0 0
        %1012 = vperm.xlu0 %1011, %v835
        %v1013 = vpop.permute.xlu0 %1012
        %1016 = vset.pattern.permute.xlu0 0
        %1017 = vperm.xlu0 %1016, %v840
        %v1018 = vpop.permute.xlu0 %1017
        %1021 = vset.pattern.permute.xlu0 0
        %1022 = vperm.xlu0 %1021, %v845
        %v1023 = vpop.permute.xlu0 %1022
        %1026 = vset.pattern.permute.xlu0 0
        %1027 = vperm.xlu0 %1026, %v850
        %v1028 = vpop.permute.xlu0 %1027
        %1031 = vset.pattern.permute.xlu0 0
        %1032 = vperm.xlu0 %1031, %v855
        %v1033 = vpop.permute.xlu0 %1032
        %v1035 = vsub.f32 %v618, %v998
        %v1036 = vsub.f32 %v620, %v998
        %v1037 = vsub.f32 %v622, %v1003
        %v1038 = vsub.f32 %v624, %v1003
        %v1039 = vsub.f32 %v628, %v1008
        %v1040 = vsub.f32 %v630, %v1008
        %v1041 = vsub.f32 %v632, %v1013
        %v1042 = vsub.f32 %v634, %v1013
        %v1043 = vsub.f32 %v638, %v1018
        %v1044 = vsub.f32 %v640, %v1018
        %v1045 = vsub.f32 %v642, %v1023
        %v1046 = vsub.f32 %v644, %v1023
        %v1047 = vsub.f32 %v648, %v1028
        %v1048 = vsub.f32 %v650, %v1028
        %v1049 = vsub.f32 %v652, %v1033
        %v1050 = vsub.f32 %v654, %v1033
        %v1051 = vld [vmem:[%s2] sm:$0xff]
        %v1052 = vld [vmem:[%s2 + $0x8] sm:$0xff]
        %v1053 = vld [vmem:[%s2 + $0x10] sm:$0xff]
        %v1054 = vld [vmem:[%s2 + $0x18] sm:$0xff]
        %v1055 = vld [vmem:[%s2 + $0x20] sm:$0xff]
        %v1056 = vld [vmem:[%s2 + $0x28] sm:$0xff]
        %v1057 = vld [vmem:[%s2 + $0x30] sm:$0xff]
        %v1058 = vld [vmem:[%s2 + $0x38] sm:$0xff]
        %v1059 = vmul.f32 %v987, %v1051
        %v1060 = vmul.f32 %v988, %v1052
        %v1061 = vmul.f32 %v989, %v1053
        %v1062 = vmul.f32 %v990, %v1054
        %v1063 = vmul.f32 %v991, %v1055
        %v1064 = vmul.f32 %v992, %v1056
        %v1065 = vmul.f32 %v993, %v1057
        %v1066 = vmul.f32 %v994, %v1058
        %1068 = vset.pattern.permute.xlu0 0
        %1069 = vperm.xlu0 %1068, %v1059
        %v1070 = vpop.permute.xlu0 %1069
        %1073 = vset.pattern.permute.xlu0 0
        %1074 = vperm.xlu0 %1073, %v1060
        %v1075 = vpop.permute.xlu0 %1074
        %1078 = vset.pattern.permute.xlu0 0
        %1079 = vperm.xlu0 %1078, %v1061
        %v1080 = vpop.permute.xlu0 %1079
        %1083 = vset.pattern.permute.xlu0 0
        %1084 = vperm.xlu0 %1083, %v1062
        %v1085 = vpop.permute.xlu0 %1084
        %1088 = vset.pattern.permute.xlu0 0
        %1089 = vperm.xlu0 %1088, %v1063
        %v1090 = vpop.permute.xlu0 %1089
        %1093 = vset.pattern.permute.xlu0 0
        %1094 = vperm.xlu0 %1093, %v1064
        %v1095 = vpop.permute.xlu0 %1094
        %1098 = vset.pattern.permute.xlu0 0
        %1099 = vperm.xlu0 %1098, %v1065
        %v1100 = vpop.permute.xlu0 %1099
        %1103 = vset.pattern.permute.xlu0 0
        %1104 = vperm.xlu0 %1103, %v1066
        %v1105 = vpop.permute.xlu0 %1104
        %v1107 = vmul.f32 %v1035, %v1070
        %v1108 = vmul.f32 %v1036, %v1070
        %v1109 = vmul.f32 %v1037, %v1075
        %v1110 = vmul.f32 %v1038, %v1075
        %v1111 = vmul.f32 %v1039, %v1080
        %v1112 = vmul.f32 %v1040, %v1080
        %v1113 = vmul.f32 %v1041, %v1085
        %v1114 = vmul.f32 %v1042, %v1085
        %v1115 = vmul.f32 %v1043, %v1090
        %v1116 = vmul.f32 %v1044, %v1090
        %v1117 = vmul.f32 %v1045, %v1095
        %v1118 = vmul.f32 %v1046, %v1095
        %v1119 = vmul.f32 %v1047, %v1100
        %v1120 = vmul.f32 %v1048, %v1100
        %v1121 = vmul.f32 %v1049, %v1105
        %v1122 = vmul.f32 %v1050, %v1105
        %v1123 = vld [vmem:[%s3] sm:$0xff]
        %v1124 = vld [vmem:[%s3 + $0x8] sm:$0xff]
        %v1125 = vld [vmem:[%s3 + $0x10] sm:$0xff]
        %v1126 = vld [vmem:[%s3 + $0x18] sm:$0xff]
        %v1127 = vld [vmem:[%s3 + $0x20] sm:$0xff]
        %v1128 = vld [vmem:[%s3 + $0x28] sm:$0xff]
        %v1129 = vld [vmem:[%s3 + $0x30] sm:$0xff]
        %v1130 = vld [vmem:[%s3 + $0x38] sm:$0xff]
        %1132 = vset.pattern.permute.xlu0 0
        %1133 = vperm.xlu0 %1132, %v1123
        %v1134 = vpop.permute.xlu0 %1133
        %1137 = vset.pattern.permute.xlu0 0
        %1138 = vperm.xlu0 %1137, %v1124
        %v1139 = vpop.permute.xlu0 %1138
        %1142 = vset.pattern.permute.xlu0 0
        %1143 = vperm.xlu0 %1142, %v1125
        %v1144 = vpop.permute.xlu0 %1143
        %1147 = vset.pattern.permute.xlu0 0
        %1148 = vperm.xlu0 %1147, %v1126
        %v1149 = vpop.permute.xlu0 %1148
        %1152 = vset.pattern.permute.xlu0 0
        %1153 = vperm.xlu0 %1152, %v1127
        %v1154 = vpop.permute.xlu0 %1153
        %1157 = vset.pattern.permute.xlu0 0
        %1158 = vperm.xlu0 %1157, %v1128
        %v1159 = vpop.permute.xlu0 %1158
        %1162 = vset.pattern.permute.xlu0 0
        %1163 = vperm.xlu0 %1162, %v1129
        %v1164 = vpop.permute.xlu0 %1163
        %1167 = vset.pattern.permute.xlu0 0
        %1168 = vperm.xlu0 %1167, %v1130
        %v1169 = vpop.permute.xlu0 %1168
        %v1171 = vadd.f32 %v1107, %v1134
        %v1172 = vadd.f32 %v1108, %v1134
        %v1173 = vadd.f32 %v1109, %v1139
        %v1174 = vadd.f32 %v1110, %v1139
        %v1175 = vadd.f32 %v1111, %v1144
        %v1176 = vadd.f32 %v1112, %v1144
        %v1177 = vadd.f32 %v1113, %v1149
        %v1178 = vadd.f32 %v1114, %v1149
        %v1179 = vadd.f32 %v1115, %v1154
        %v1180 = vadd.f32 %v1116, %v1154
        %v1181 = vadd.f32 %v1117, %v1159
        %v1182 = vadd.f32 %v1118, %v1159
        %v1183 = vadd.f32 %v1119, %v1164
        %v1184 = vadd.f32 %v1120, %v1164
        %v1185 = vadd.f32 %v1121, %v1169
        %v1186 = vadd.f32 %v1122, %v1169
        %v1187 = vmax.f32 %v1171, 0.0
        %v1188 = vmax.f32 %v1172, 0.0
        %v1189 = vmax.f32 %v1173, 0.0
        %v1190 = vmax.f32 %v1174, 0.0
        %v1191 = vmax.f32 %v1175, 0.0
        %v1192 = vmax.f32 %v1176, 0.0
        %v1193 = vmax.f32 %v1177, 0.0
        %v1194 = vmax.f32 %v1178, 0.0
        %v1195 = vmax.f32 %v1179, 0.0
        %v1196 = vmax.f32 %v1180, 0.0
        %v1197 = vmax.f32 %v1181, 0.0
        %v1198 = vmax.f32 %v1182, 0.0
        %v1199 = vmax.f32 %v1183, 0.0
        %v1200 = vmax.f32 %v1184, 0.0
        %v1201 = vmax.f32 %v1185, 0.0
        %v1202 = vmax.f32 %v1186, 0.0
        %1203 = vst [vmem:[%s242] sm:$0xff] %v1187
        %1204 = vst [vmem:[%s242 + $0x8] sm:$0xff] %v1188
        %1205 = vst [vmem:[%s242 + $0x10] sm:$0xff] %v1189
        %1206 = vst [vmem:[%s242 + $0x18] sm:$0xff] %v1190
        %1207 = vst [vmem:[%s242 + $0x20] sm:$0xff] %v1191
        %1208 = vst [vmem:[%s242 + $0x28] sm:$0xff] %v1192
        %1209 = vst [vmem:[%s242 + $0x30] sm:$0xff] %v1193
        %1210 = vst [vmem:[%s242 + $0x38] sm:$0xff] %v1194
        %1211 = vst [vmem:[%s242 + $0x40] sm:$0xff] %v1195
        %1212 = vst [vmem:[%s242 + $0x48] sm:$0xff] %v1196
        %1213 = vst [vmem:[%s242 + $0x50] sm:$0xff] %v1197
        %1214 = vst [vmem:[%s242 + $0x58] sm:$0xff] %v1198
        %1215 = vst [vmem:[%s242 + $0x60] sm:$0xff] %v1199
        %1216 = vst [vmem:[%s242 + $0x68] sm:$0xff] %v1200
        %1217 = vst [vmem:[%s242 + $0x70] sm:$0xff] %v1201
        %1218 = vst [vmem:[%s242 + $0x78] sm:$0xff] %v1202
        %s1219 = sand.u32 %s140, 1
        %s1220 = scalar_lea.sflag [#allocation4], %s1219
        %s1221 = sand.u32 %s140, 1
        %s1222 = smul.addr %s1221, 128
        %s1223 = scalar_lea.vmem [#allocation5], %s1222
        // Predicated region
        $region45: #{tpu_custom_call.1} parent=39 // pred_check
          %p1224 = pneg %p150
        $region46: #{tpu_custom_call.1} parent=39 // pred_check_branch
          %1226 = sbr.rel (%p1224) target = $region48
        $region47: #{tpu_custom_call.1} parent=39 // pred_region
          %s1228 = ssub.s32 2048, 2048
          %1229 = vsyncadd %s1220, %s1228
          %s1230 = smul.addr %s22, 16
          %s1231 = smul.addr %s1230, 128
          %s1232 = scalar_lea.hbm %s5, %s1231
          %s1233 = sshll.u32 %s1223, 4
          %s1234 = int_to_ptr.vmem [resolvable:$true] %s1233
          %1239 = dma.vmem_to_hbm [thread:$0]  %s1234, 2048, %s1232, %s1220, 256, 256, 16
        $region48: #{tpu_custom_call.1} parent=39 // pred_fallthru
          _
      $region40: #{tpu_custom_call.1} parent=5 // pred_fallthru
        _
      %p1240 = scmp.le.s32.totalorder 2, %s17
      // Predicated region
      $region49: #{tpu_custom_call.1} parent=5 // pred_check
        %p1241 = pneg %p1240
      $region50: #{tpu_custom_call.1} parent=5 // pred_check_branch
        %1243 = sbr.rel (%p1241) target = $region52
      $region51: #{tpu_custom_call.1} parent=5 // pred_region
        %s1244 = ssub.s32 %s17, 2
        // Predicated region
        $region53: #{tpu_custom_call.1} parent=51 // pred_check
          %p1245 = pneg %p156
        $region54: #{tpu_custom_call.1} parent=51 // pred_check_branch
          %1247 = sbr.rel (%p1245) target = $region56
        $region55: #{tpu_custom_call.1} parent=51 // pred_region
          %s1248 = sand.u32 %s141, 1
          %s1249 = scalar_lea.sflag [#allocation4], %s1248
          %s1250 = sand.u32 %s141, 1
          %s1251 = smul.addr %s1250, 128
          %s1252 = scalar_lea.vmem [#allocation5], %s1251
          %1253 = dma.done %s1249, 2048
        $region56: #{tpu_custom_call.1} parent=51 // pred_fallthru
          _
      $region52: #{tpu_custom_call.1} parent=5 // pred_fallthru
        _
    $region6: #{tpu_custom_call.1} parent=1 // loop_footer
      %s21 = sadd.s32 1, %s17
    $region7: #{tpu_custom_call.1} parent=1 // loop_footer_branch
      %16 = sbr.rel target = $region3
    $region8: #{tpu_custom_call.1} parent=1 // loop_exit
      _
    %1254 = vsyncpa [#allocation3], 1
    %s1255 = scalar_lea.sflag [#allocation3], 1
    %1256 = vsyncpa %s1255, 1
    %1257 = vsyncpa [#allocation4], 1
    %s1258 = scalar_lea.sflag [#allocation4], 1
    %1259 = vsyncpa %s1258, 1

</llo_original>
